<compile_context>
chip_gen: v5e
topology: v5e:2x2
jax: 0.10.0
libtpu: 0.0.40
codegen_flags: <defaults>
</compile_context>

<pallas_src>
import jax
import jax.numpy as jnp
from jax.experimental import pallas as pl
from jax.experimental.pallas import tpu as pltpu


# Packed-parameter layout (flat f32[17], PyTorch row-major conventions):
#   [0:6]   fc1.weight (3, 2) row-major  -> w1[o, i] at index 2*o + i
#   [6:9]   fc1.bias   (3,)
#   [9:15]  fc2.weight (2, 3) row-major  -> w2[o, j] at index 9 + 3*o + j
#   [15:17] fc2.bias   (2,)


def mlp_kernel(params_ref, x_ref, o_ref):
    # params_ref: SMEM f32[17].
    # x_ref / o_ref: VMEM f32[2, R, 128] blocks (R a multiple of 8), batch
    # folded onto (sublane=R, lane=128); indexing the leading feature axis
    # yields dense full-tile slabs.
    x0 = x_ref[0]                      # (R, 128)
    x1 = x_ref[1]                      # (R, 128)
    w = params_ref

    # fc1 + ReLU: pure VPU broadcast-FMAs from SMEM scalars (MXU would be
    # >97% idle at K=2 / N=3 and still pay push/pop latency).
    h0 = jnp.maximum(w[0] * x0 + w[1] * x1 + w[6], 0.0)
    h1 = jnp.maximum(w[2] * x0 + w[3] * x1 + w[7], 0.0)
    h2 = jnp.maximum(w[4] * x0 + w[5] * x1 + w[8], 0.0)

    # fc2: assemble both output feature rows and write the whole block once
    # (single unmasked full-block store).
    y0 = w[9] * h0 + w[10] * h1 + w[11] * h2 + w[15]
    y1 = w[12] * h0 + w[13] * h1 + w[14] * h2 + w[16]
    o_ref[...] = jnp.stack([y0, y1], axis=0)


def net_forward(x, w1, b1, w2, b2, *, max_block_rows=1024):
    """x: (B, 2) f32.  w1: (3, 2), b1: (3,), w2: (2, 3), b2: (2,) (PyTorch layout).

    Returns (B, 2) f32 with the same semantics as Net.forward.
    """
    B = x.shape[0]

    # Single packed parameter vector -> SMEM (17 floats, 68 bytes).
    params = jnp.concatenate(
        [w1.reshape(-1), b1.reshape(-1), w2.reshape(-1), b2.reshape(-1)]
    ).astype(jnp.float32)

    # Fold batch onto dense (8, 128) tiles: rows of 128 batch elements each.
    total_rows = pl.cdiv(B, 128)
    if total_rows <= 8:
        block_rows = 8
    else:
        # Keep >= 2 grid blocks when the batch allows (v7x megacore: 2 TCs per
        # chip share the "parallel" axis), cap the block, round to sublanes.
        half = pl.cdiv(total_rows, 2)
        block_rows = min(max_block_rows, ((half + 7) // 8) * 8)
    n_blk = pl.cdiv(total_rows, block_rows)
    rows_p = n_blk * block_rows
    Bp = rows_p * 128

    # Layout glue: (B, 2) -> (2, B) -> zero-pad -> (2, rows_p, 128).
    xt = jnp.pad(x.T.astype(jnp.float32), ((0, 0), (0, Bp - B)))
    xt = xt.reshape(2, rows_p, 128)

    out_t = pl.pallas_call(
        mlp_kernel,
        out_shape=jax.ShapeDtypeStruct((2, rows_p, 128), jnp.float32),
        grid=(n_blk,),
        in_specs=[
            # Packed parameters: one tiny SMEM-resident operand (scalar reads).
            pl.BlockSpec(memory_space=pltpu.MemorySpace.SMEM),
            # Activations: dense (2, block_rows, 128) batch slabs.
            pl.BlockSpec((2, block_rows, 128), lambda i: (0, i, 0)),
        ],
        out_specs=pl.BlockSpec((2, block_rows, 128), lambda i: (0, i, 0)),
        compiler_params=pltpu.CompilerParams(
            dimension_semantics=("parallel",)),  # batch tiles are independent
    )(params, xt)

    # Back to the PyTorch (B, 2) convention; padded tail columns are dropped.
    return out_t.reshape(2, Bp)[:, :B].T


def init_params(key):
    """Deterministic init mirroring nn.Linear shapes/bounds.

    fc1.weight: (3, 2), fc1.bias: (3,), fc2.weight: (2, 3), fc2.bias: (2,)
    with uniform(-1/sqrt(fan_in), 1/sqrt(fan_in)).
    """
    k1, k2, k3, k4 = jax.random.split(key, 4)
    bound1 = 1.0 / jnp.sqrt(2.0)   # fan_in = 2
    bound2 = 1.0 / jnp.sqrt(3.0)   # fan_in = 3
    w1 = jax.random.uniform(k1, (3, 2), jnp.float32, -bound1, bound1)
    b1 = jax.random.uniform(k2, (3,), jnp.float32, -bound1, bound1)
    w2 = jax.random.uniform(k3, (2, 3), jnp.float32, -bound2, bound2)
    b2 = jax.random.uniform(k4, (2,), jnp.float32, -bound2, bound2)
    return w1, b1, w2, b2


if __name__ == "__main__":
    key = jax.random.PRNGKey(0)
    kx, kp = jax.random.split(key)

    # B = 2500 exercises both the ragged-tail padding (not a multiple of 128)
    # and a 2-block grid (the v7x megacore split) while staying small.
    B = 2500
    x = jax.random.normal(kx, (B, 2), jnp.float32)
    w1, b1, w2, b2 = init_params(kp)

    out = net_forward(x, w1, b1, w2, b2)
    out = jax.block_until_ready(out)

    # Pure-JAX reference (same semantics as the PyTorch forward).
    ref = jnp.maximum(x @ w1.T + b1, 0.0) @ w2.T + b2
    assert out.shape == (B, 2)
    assert jnp.allclose(out, ref, atol=1e-5, rtol=1e-5), "mismatch vs reference"

    print("KERNEL_OK")
</pallas_src>

<mosaic_0001>
module attributes {stable_mosaic.version = 11 : i64} {
  func.func @mlp_kernel(%arg0: i32, %arg1: memref<17xf32, #tpu.memory_space<smem>>, %arg2: memref<2x16x128xf32, #tpu.memory_space<vmem>>, %arg3: memref<2x16x128xf32, #tpu.memory_space<vmem>>) attributes {dimension_semantics = [#tpu.dimension_semantics<parallel>], iteration_bounds = array<i64: 2>, scalar_prefetch = 0 : i64, scratch_operands = 0 : i64, tpu.core_type = #tpu.core_type<tc>, window_params = [{transform_indices = @transform_0, window_bounds = array<i64: 17>}, {transform_indices = @transform_1, window_bounds = array<i64: 2, 16, 128>}, {transform_indices = @transform_2, window_bounds = array<i64: 2, 16, 128>}]} {
    %c0 = arith.constant 0 : index
    %c0_0 = arith.constant 0 : index
    %c0_1 = arith.constant 0 : index
    %0 = vector.load %arg2[%c0, %c0_0, %c0_1] : memref<2x16x128xf32, #tpu.memory_space<vmem>>, vector<1x16x128xf32>
    %1 = vector.shape_cast %0 : vector<1x16x128xf32> to vector<16x128xf32>
    %c1 = arith.constant 1 : index
    %c0_2 = arith.constant 0 : index
    %c0_3 = arith.constant 0 : index
    %2 = vector.load %arg2[%c1, %c0_2, %c0_3] : memref<2x16x128xf32, #tpu.memory_space<vmem>>, vector<1x16x128xf32>
    %3 = vector.shape_cast %2 : vector<1x16x128xf32> to vector<16x128xf32>
    %c0_4 = arith.constant 0 : index
    %4 = memref.load %arg1[%c0_4] : memref<17xf32, #tpu.memory_space<smem>>
    %5 = vector.broadcast %4 : f32 to vector<16x128xf32>
    %6 = arith.mulf %5, %1 : vector<16x128xf32>
    %c1_5 = arith.constant 1 : index
    %7 = memref.load %arg1[%c1_5] : memref<17xf32, #tpu.memory_space<smem>>
    %8 = vector.broadcast %7 : f32 to vector<16x128xf32>
    %9 = arith.mulf %8, %3 : vector<16x128xf32>
    %10 = arith.addf %6, %9 : vector<16x128xf32>
    %c6 = arith.constant 6 : index
    %11 = memref.load %arg1[%c6] : memref<17xf32, #tpu.memory_space<smem>>
    %12 = vector.broadcast %11 : f32 to vector<16x128xf32>
    %13 = arith.addf %10, %12 : vector<16x128xf32>
    %cst = arith.constant 0.000000e+00 : f32
    %14 = vector.broadcast %cst : f32 to vector<16x128xf32>
    %15 = arith.maximumf %13, %14 : vector<16x128xf32>
    %c2 = arith.constant 2 : index
    %16 = memref.load %arg1[%c2] : memref<17xf32, #tpu.memory_space<smem>>
    %17 = vector.broadcast %16 : f32 to vector<16x128xf32>
    %18 = arith.mulf %17, %1 : vector<16x128xf32>
    %c3 = arith.constant 3 : index
    %19 = memref.load %arg1[%c3] : memref<17xf32, #tpu.memory_space<smem>>
    %20 = vector.broadcast %19 : f32 to vector<16x128xf32>
    %21 = arith.mulf %20, %3 : vector<16x128xf32>
    %22 = arith.addf %18, %21 : vector<16x128xf32>
    %c7 = arith.constant 7 : index
    %23 = memref.load %arg1[%c7] : memref<17xf32, #tpu.memory_space<smem>>
    %24 = vector.broadcast %23 : f32 to vector<16x128xf32>
    %25 = arith.addf %22, %24 : vector<16x128xf32>
    %cst_6 = arith.constant 0.000000e+00 : f32
    %26 = vector.broadcast %cst_6 : f32 to vector<16x128xf32>
    %27 = arith.maximumf %25, %26 : vector<16x128xf32>
    %c4 = arith.constant 4 : index
    %28 = memref.load %arg1[%c4] : memref<17xf32, #tpu.memory_space<smem>>
    %29 = vector.broadcast %28 : f32 to vector<16x128xf32>
    %30 = arith.mulf %29, %1 : vector<16x128xf32>
    %c5 = arith.constant 5 : index
    %31 = memref.load %arg1[%c5] : memref<17xf32, #tpu.memory_space<smem>>
    %32 = vector.broadcast %31 : f32 to vector<16x128xf32>
    %33 = arith.mulf %32, %3 : vector<16x128xf32>
    %34 = arith.addf %30, %33 : vector<16x128xf32>
    %c8 = arith.constant 8 : index
    %35 = memref.load %arg1[%c8] : memref<17xf32, #tpu.memory_space<smem>>
    %36 = vector.broadcast %35 : f32 to vector<16x128xf32>
    %37 = arith.addf %34, %36 : vector<16x128xf32>
    %cst_7 = arith.constant 0.000000e+00 : f32
    %38 = vector.broadcast %cst_7 : f32 to vector<16x128xf32>
    %39 = arith.maximumf %37, %38 : vector<16x128xf32>
    %c9 = arith.constant 9 : index
    %40 = memref.load %arg1[%c9] : memref<17xf32, #tpu.memory_space<smem>>
    %41 = vector.broadcast %40 : f32 to vector<16x128xf32>
    %42 = arith.mulf %41, %15 : vector<16x128xf32>
    %c10 = arith.constant 10 : index
    %43 = memref.load %arg1[%c10] : memref<17xf32, #tpu.memory_space<smem>>
    %44 = vector.broadcast %43 : f32 to vector<16x128xf32>
    %45 = arith.mulf %44, %27 : vector<16x128xf32>
    %46 = arith.addf %42, %45 : vector<16x128xf32>
    %c11 = arith.constant 11 : index
    %47 = memref.load %arg1[%c11] : memref<17xf32, #tpu.memory_space<smem>>
    %48 = vector.broadcast %47 : f32 to vector<16x128xf32>
    %49 = arith.mulf %48, %39 : vector<16x128xf32>
    %50 = arith.addf %46, %49 : vector<16x128xf32>
    %c15 = arith.constant 15 : index
    %51 = memref.load %arg1[%c15] : memref<17xf32, #tpu.memory_space<smem>>
    %52 = vector.broadcast %51 : f32 to vector<16x128xf32>
    %53 = arith.addf %50, %52 : vector<16x128xf32>
    %c12 = arith.constant 12 : index
    %54 = memref.load %arg1[%c12] : memref<17xf32, #tpu.memory_space<smem>>
    %55 = vector.broadcast %54 : f32 to vector<16x128xf32>
    %56 = arith.mulf %55, %15 : vector<16x128xf32>
    %c13 = arith.constant 13 : index
    %57 = memref.load %arg1[%c13] : memref<17xf32, #tpu.memory_space<smem>>
    %58 = vector.broadcast %57 : f32 to vector<16x128xf32>
    %59 = arith.mulf %58, %27 : vector<16x128xf32>
    %60 = arith.addf %56, %59 : vector<16x128xf32>
    %c14 = arith.constant 14 : index
    %61 = memref.load %arg1[%c14] : memref<17xf32, #tpu.memory_space<smem>>
    %62 = vector.broadcast %61 : f32 to vector<16x128xf32>
    %63 = arith.mulf %62, %39 : vector<16x128xf32>
    %64 = arith.addf %60, %63 : vector<16x128xf32>
    %c16 = arith.constant 16 : index
    %65 = memref.load %arg1[%c16] : memref<17xf32, #tpu.memory_space<smem>>
    %66 = vector.broadcast %65 : f32 to vector<16x128xf32>
    %67 = arith.addf %64, %66 : vector<16x128xf32>
    %68 = vector.shape_cast %53 : vector<16x128xf32> to vector<1x16x128xf32>
    %69 = vector.shape_cast %67 : vector<16x128xf32> to vector<1x16x128xf32>
    %70 = tpu.concatenate %68, %69 in 0 : vector<1x16x128xf32>, vector<1x16x128xf32> -> vector<2x16x128xf32>
    %c0_8 = arith.constant 0 : index
    %c0_9 = arith.constant 0 : index
    %c0_10 = arith.constant 0 : index
    %71 = vector.load %arg3[%c0_8, %c0_9, %c0_10] : memref<2x16x128xf32, #tpu.memory_space<vmem>>, vector<2x16x128xf32>
    tpu.vector_store %arg3[%c0_8, %c0_9, %c0_10], %70 {strides = array<i32>} : memref<2x16x128xf32, #tpu.memory_space<vmem>>, vector<2x16x128xf32>,
    return
  }
  func.func @transform_0(%arg0: i32) -> i32 {
    %c0_i32 = arith.constant 0 : i32
    %c0_i32_0 = arith.constant 0 : i32
    return %c0_i32 : i32
  }
  func.func @transform_1(%arg0: i32) -> (i32, i32, i32) {
    %c0_i32 = arith.constant 0 : i32
    %c0_i32_0 = arith.constant 0 : i32
    %c0_i32_1 = arith.constant 0 : i32
    return %c0_i32, %arg0, %c0_i32_0 : i32, i32, i32
  }
  func.func @transform_2(%arg0: i32) -> (i32, i32, i32) {
    %c0_i32 = arith.constant 0 : i32
    %c0_i32_0 = arith.constant 0 : i32
    %c0_i32_1 = arith.constant 0 : i32
    return %c0_i32, %arg0, %c0_i32_0 : i32, i32, i32
  }
}

</mosaic_0001>

<llo_original>
// kernel: tpu_custom_call.1
$region0: #{tpu_custom_call.1}
  #allocation0 [shape = 'u32[]', space=smem, size = 0x4, offset = 0x4, fixed_abs, tag = 'smem constant byte address 0x4 - core index']
  #allocation1 [shape = 'u32[72,128]{1,0:T(1,128)}', space=vmem, size = 0x9000, scoped, tag = 'internal scratch']
  #allocation8 [shape = 's32[]', space=sflag, size = 0x4, offset = 0, fixed_abs, tag = 'sflag constant byte address 0x0 - dummy sync flag']
  #allocation10 [shape = 's32[]', space=sflag, size = 0x4, offset = 0, fixed_abs, tag = 'sflag constant byte address 0x0 - dummy sync flag']
  %s0 = inlined_call_operand.hbm [shape: f32[17], index: 0, kind: input, shape index: {}]
  %s1 = inlined_call_operand.hbm [shape: f32[2,32,128], index: 1, kind: input, shape index: {}]
  %s2 = inlined_call_operand.hbm [shape: f32[2,32,128], index: 2, kind: output, shape index: {}]
  %s3 = sld [smem:[#allocation0]]
  $region49: #{tpu_custom_call.1} parent=0
    _
  %s5 = ssub.s32 1, %s3
  %s6 = scalar_select 0, %s5, %s3
  $region1: #{tpu_custom_call.1} parent=0
    #allocation2 [shape = 'u8[512]{0}', space=smem, size = 0x200, scoped, tag = 'input window, operand 0, single buffered']
    #allocation3 [shape = 's32[2]{0}', space=sflag, size = 0x8, scoped, tag = 'scoped memory for tpu_custom_call.1']
    #allocation4 [shape = 's32[2]{0}', space=sflag, size = 0x8, scoped, tag = 'scoped memory for tpu_custom_call.1']
    #allocation5 [shape = 's32[2]{0}', space=sflag, size = 0x8, scoped, tag = 'scoped memory for tpu_custom_call.1']
    #allocation6 [shape = 'u8[32768]{0}', space=vmem, size = 0x8000, scoped, tag = 'input window, operand 1']
    #allocation7 [shape = 'u8[32768]{0}', space=vmem, size = 0x8000, scoped, tag = 'output window, operand 0']
    %7 = vsyncpa [#allocation5], 0
    %8 = vsyncpa [#allocation3], 0
    %s9 = scalar_lea.sflag [#allocation3], 1
    %10 = vsyncpa %s9, 0
    %11 = vsyncpa [#allocation4], 0
    %s12 = scalar_lea.sflag [#allocation4], 1
    %13 = vsyncpa %s12, 0
    loop: start=0, step=1, limit=4
    $region2: #{tpu_custom_call.1} parent=1 // loop_pre_header
      _
    $region3: #{tpu_custom_call.1} parent=1 // loop_header
      %s15 = sphi 0, %s19
      %p16 = scmp.ge.s32.totalorder %s15, 4
      %s23 = sphi 0, %s23
      %s25 = sphi 0, %s23
      %s26 = sphi 0, %s25
      %s40 = sphi 0, %s26
      %s46 = sphi 0, %s48
      %s49 = sphi 0, %s46
      %s50 = sphi 0, %s49
      %s66 = sphi 0, %s50
      %s72 = sphi 0, %s74
      %s75 = sphi 0, %s72
      %s76 = sphi 0, %s75
      %s92 = sphi 0, %s76
    $region4: #{tpu_custom_call.1} parent=1 // loop_header_branch
      %18 = sbr.rel (%p16) target = $region8
    $region5: #{tpu_custom_call.1} parent=1 // loop_body
      %s20 = ssub.s32 %s15, 1
      %s21 = ssub.s32 %s15, 2
      %s22 = sadd.s32 %s15, 1
      %s24 = sadd.s32 %s23, 1
      %p27 = scmp.eq.s32.totalorder %s15, 1
      %p28 = scmp.ne.s32.totalorder %s23, %s25
      %p29 = scmp.eq.s32.totalorder %s15, 0
      %p30 = por %p28, %p29
      %p31 = scmp.ne.s32.totalorder %s23, %s25
      %p32 = scmp.eq.s32.totalorder %s20, 1
      %p33 = por %p31, %p32
      %p34 = scmp.ne.s32.totalorder %s25, %s26
      %p35 = scmp.eq.s32.totalorder %s20, 0
      %p36 = por %p34, %p35
      %p37 = scmp.ne.s32.totalorder %s25, %s26
      %p38 = scmp.eq.s32.totalorder %s21, 1
      %p39 = por %p37, %p38
      %p41 = scmp.ne.s32.totalorder %s26, %s40
      %p42 = scmp.eq.s32.totalorder %s21, 0
      %p43 = por %p41, %p42
      %s44 = ssub.s32 %s15, %s22
      %p45 = scmp.eq.s32.totalorder %s44, 0
      %s47 = sadd.s32 %s46, 1
      %s48 = scalar_select %p45, %s46, %s47
      %p51 = pneg %p45
      %p52 = scmp.eq.s32.totalorder %s15, 1
      %p53 = por %p51, %p52
      %p54 = scmp.ne.s32.totalorder %s46, %s49
      %p55 = scmp.eq.s32.totalorder %s15, 0
      %p56 = por %p54, %p55
      %p57 = scmp.ne.s32.totalorder %s46, %s49
      %p58 = scmp.eq.s32.totalorder %s20, 1
      %p59 = por %p57, %p58
      %p60 = scmp.ne.s32.totalorder %s49, %s50
      %p61 = scmp.eq.s32.totalorder %s20, 0
      %p62 = por %p60, %p61
      %p63 = scmp.ne.s32.totalorder %s49, %s50
      %p64 = scmp.eq.s32.totalorder %s21, 1
      %p65 = por %p63, %p64
      %p67 = scmp.ne.s32.totalorder %s50, %s66
      %p68 = scmp.eq.s32.totalorder %s21, 0
      %p69 = por %p67, %p68
      %s70 = ssub.s32 %s15, %s22
      %p71 = scmp.eq.s32.totalorder %s70, 0
      %s73 = sadd.s32 %s72, 1
      %s74 = scalar_select %p71, %s72, %s73
      %p77 = pneg %p71
      %p78 = scmp.eq.s32.totalorder %s15, 1
      %p79 = por %p77, %p78
      %p80 = scmp.ne.s32.totalorder %s72, %s75
      %p81 = scmp.eq.s32.totalorder %s15, 0
      %p82 = por %p80, %p81
      %p83 = scmp.ne.s32.totalorder %s72, %s75
      %p84 = scmp.eq.s32.totalorder %s20, 1
      %p85 = por %p83, %p84
      %p86 = scmp.ne.s32.totalorder %s75, %s76
      %p87 = scmp.eq.s32.totalorder %s20, 0
      %p88 = por %p86, %p87
      %p89 = scmp.ne.s32.totalorder %s75, %s76
      %p90 = scmp.eq.s32.totalorder %s21, 1
      %p91 = por %p89, %p90
      %p93 = scmp.ne.s32.totalorder %s76, %s92
      %p94 = scmp.eq.s32.totalorder %s21, 0
      %p95 = por %p93, %p94
      %p96 = scmp.le.s32.totalorder 1, %s15
      %p97 = scmp.lt.s32.totalorder %s15, 3
      %p98 = pnand %p96, %p97
      %p99 = pneg %p98
      // Predicated region
      $region9: #{tpu_custom_call.1} parent=5 // pred_check
        _
      $region10: #{tpu_custom_call.1} parent=5 // pred_check_branch
        %101 = sbr.rel (%p98) target = $region12
      $region11: #{tpu_custom_call.1} parent=5 // pred_region
        %s102 = ssub.s32 %s15, 1
        // Predicated region
        $region13: #{tpu_custom_call.1} parent=11 // pred_check
          %p103 = pneg %p36
        $region14: #{tpu_custom_call.1} parent=11 // pred_check_branch
          %105 = sbr.rel (%p103) target = $region16
        $region15: #{tpu_custom_call.1} parent=11 // pred_region
          %107 = vsyncadd [#allocation5], 0
          %s109 = sshll.u32 %s0, 4
          %s110 = int_to_ptr.hbm [resolvable:$true] %s109
          %112 = dma.hbm_to_smem %s110, 16, [#allocation2], [#allocation5]
        $region16: #{tpu_custom_call.1} parent=11 // pred_fallthru
          _
      $region12: #{tpu_custom_call.1} parent=5 // pred_fallthru
        _
      %p113 = scmp.lt.s32.totalorder %s15, 2
      // Predicated region
      $region17: #{tpu_custom_call.1} parent=5 // pred_check
        %p114 = pneg %p113
      $region18: #{tpu_custom_call.1} parent=5 // pred_check_branch
        %116 = sbr.rel (%p114) target = $region20
      $region19: #{tpu_custom_call.1} parent=5 // pred_region
        // Predicated region
        $region21: #{tpu_custom_call.1} parent=19 // pred_check
          %p117 = pneg %p56
        $region22: #{tpu_custom_call.1} parent=19 // pred_check_branch
          %119 = sbr.rel (%p117) target = $region24
        $region23: #{tpu_custom_call.1} parent=19 // pred_region
          #allocation9 [shape = 'u32[6]{0}', space=smem, size = 0x18, scoped, tag = 'DMA stride descriptor']
          %s120 = sand.u32 %s46, 1
          %s121 = scalar_lea.sflag [#allocation3], %s120
          %s122 = sand.u32 %s46, 1
          %s123 = smul.addr %s122, 32
          %s124 = scalar_lea.vmem [#allocation6], %s123
          %s125 = smul.u32 2, %s15
          %127 = vsyncadd %s121, 0
          %s128 = smul.addr %s125, 8
          %s129 = scalar_lea.hbm %s1, %s128
          %s131 = sshll.u32 1, 14
          %s132 = sxor.u32 4294967295, %s131
          %s134 = sld [smem:[#allocation0]]
          %s135 = sadd.s32 2, %s134
          %s137 = sshll.u32 7, 26
          %s138 = sxor.u32 4294967295, %s137
          %s139 = sand.u32 0, %s138
          %s140 = sshll.u32 %s135, 26
          %s141 = sor.u32 %s139, %s140
          %s142 = sshll.u32 %s129, 4
          %s143 = int_to_ptr.hbm [resolvable:$true] %s142
          %s144 = sshll.u32 %s124, 4
          %s145 = int_to_ptr.vmem [resolvable:$true] %s144
          %151 = sst [smem:[#allocation9]] 512
          %s152 = scalar_lea.smem [#allocation9], 1
          %153 = sst [smem:[%s152]] 256
          %s154 = scalar_lea.smem [#allocation9], 2
          %155 = sst [smem:[%s154]] 2
          %s156 = scalar_lea.smem [#allocation9], 3
          %157 = sst [smem:[%s156]] 128
          %s158 = scalar_lea.smem [#allocation9], 4
          %159 = sst [smem:[%s158]] 128
          %s160 = scalar_lea.smem [#allocation9], 5
          %161 = sst [smem:[%s160]] 8
          %163 = dma.general %s143, 512, %s145, %s121, [#allocation8], [#allocation9], %s141, 0
        $region24: #{tpu_custom_call.1} parent=19 // pred_fallthru
          _
      $region20: #{tpu_custom_call.1} parent=5 // pred_fallthru
        _
      %p164 = scmp.le.s32.totalorder 1, %s15
      %p165 = scmp.lt.s32.totalorder %s15, 3
      %p166 = pnand %p164, %p165
      %p167 = pneg %p166
      // Predicated region
      $region25: #{tpu_custom_call.1} parent=5 // pred_check
        _
      $region26: #{tpu_custom_call.1} parent=5 // pred_check_branch
        %169 = sbr.rel (%p166) target = $region28
      $region27: #{tpu_custom_call.1} parent=5 // pred_region
        %s170 = ssub.s32 %s15, 1
        // Predicated region
        $region29: #{tpu_custom_call.1} parent=27 // pred_check
          %p171 = pneg %p36
        $region30: #{tpu_custom_call.1} parent=27 // pred_check_branch
          %173 = sbr.rel (%p171) target = $region32
        $region31: #{tpu_custom_call.1} parent=27 // pred_region
          %175 = dma.done [#allocation5], 16
        $region32: #{tpu_custom_call.1} parent=27 // pred_fallthru
          _
        %s176 = sand.u32 %s49, 1
        %s177 = scalar_lea.sflag [#allocation3], %s176
        %s178 = sand.u32 %s49, 1
        %s179 = smul.addr %s178, 32
        %s180 = scalar_lea.vmem [#allocation6], %s179
        // Predicated region
        $region33: #{tpu_custom_call.1} parent=27 // pred_check
          %p181 = pneg %p62
        $region34: #{tpu_custom_call.1} parent=27 // pred_check_branch
          %183 = sbr.rel (%p181) target = $region36
        $region35: #{tpu_custom_call.1} parent=27 // pred_region
          %185 = dma.done %s177, 512
        $region36: #{tpu_custom_call.1} parent=27 // pred_fallthru
          _
        %186 = sfence
        %p187 = pneg %p36
        %p188 = pneg %p33
        %s189 = sand.u32 %s49, 1
        %s190 = scalar_lea.sflag [#allocation3], %s189
        %s191 = sand.u32 %s49, 1
        %s192 = smul.addr %s191, 32
        %s193 = scalar_lea.vmem [#allocation6], %s192
        %p194 = pneg %p62
        %p195 = pneg %p59
        %p196 = pneg %p88
        %p197 = pneg %p85
        %s198 = sand.u32 %s75, 1
        %s199 = scalar_lea.sflag [#allocation4], %s198
        %s200 = sand.u32 %s75, 1
        %s201 = smul.addr %s200, 32
        %s202 = scalar_lea.vmem [#allocation7], %s201
        %s203 = smul.u32 2, %s20
        %s204 = smul.u32 2, %s20
        %v205 = vld [vmem:[%s180] sm:$0xff]
        %v206 = vld [vmem:[%s180 + $0x8] sm:$0xff]
        %s207 = scalar_lea.vmem %s180, 16 [#allocation6]
        %v208 = vld [vmem:[%s207] sm:$0xff]
        %v209 = vld [vmem:[%s207 + $0x8] sm:$0xff]
        %s210 = sld [smem:[#allocation2]]
        %v211 = vstv %s210
        %v212 = vmul.f32 %v211, %v205
        %v213 = vmul.f32 %v211, %v206
        %s214 = sld [smem:[#allocation2 + $0x1]]
        %v215 = vstv %s214
        %v216 = vmul.f32 %v215, %v208
        %v217 = vmul.f32 %v215, %v209
        %v218 = vadd.f32 %v212, %v216
        %v219 = vadd.f32 %v213, %v217
        %s220 = sld [smem:[#allocation2 + $0x6]]
        %v221 = vstv %s220
        %v222 = vadd.f32 %v218, %v221
        %v223 = vadd.f32 %v219, %v221
        %v224 = vmax.f32 %v222, 0.0
        %v225 = vmax.f32 %v223, 0.0
        %s226 = sld [smem:[#allocation2 + $0x2]]
        %v227 = vstv %s226
        %v228 = vmul.f32 %v227, %v205
        %v229 = vmul.f32 %v227, %v206
        %s230 = sld [smem:[#allocation2 + $0x3]]
        %v231 = vstv %s230
        %v232 = vmul.f32 %v231, %v208
        %v233 = vmul.f32 %v231, %v209
        %v234 = vadd.f32 %v228, %v232
        %v235 = vadd.f32 %v229, %v233
        %s236 = sld [smem:[#allocation2 + $0x7]]
        %v237 = vstv %s236
        %v238 = vadd.f32 %v234, %v237
        %v239 = vadd.f32 %v235, %v237
        %v240 = vmax.f32 %v238, 0.0
        %v241 = vmax.f32 %v239, 0.0
        %s242 = sld [smem:[#allocation2 + $0x4]]
        %v243 = vstv %s242
        %v244 = vmul.f32 %v243, %v205
        %v245 = vmul.f32 %v243, %v206
        %s246 = sld [smem:[#allocation2 + $0x5]]
        %v247 = vstv %s246
        %v248 = vmul.f32 %v247, %v208
        %v249 = vmul.f32 %v247, %v209
        %v250 = vadd.f32 %v244, %v248
        %v251 = vadd.f32 %v245, %v249
        %s252 = sld [smem:[#allocation2 + $0x8]]
        %v253 = vstv %s252
        %v254 = vadd.f32 %v250, %v253
        %v255 = vadd.f32 %v251, %v253
        %v256 = vmax.f32 %v254, 0.0
        %v257 = vmax.f32 %v255, 0.0
        %s258 = sld [smem:[#allocation2 + $0x9]]
        %v259 = vstv %s258
        %v260 = vmul.f32 %v259, %v224
        %v261 = vmul.f32 %v259, %v225
        %s262 = sld [smem:[#allocation2 + $0xa]]
        %v263 = vstv %s262
        %v264 = vmul.f32 %v263, %v240
        %v265 = vmul.f32 %v263, %v241
        %v266 = vadd.f32 %v260, %v264
        %v267 = vadd.f32 %v261, %v265
        %s268 = sld [smem:[#allocation2 + $0xb]]
        %v269 = vstv %s268
        %v270 = vmul.f32 %v269, %v256
        %v271 = vmul.f32 %v269, %v257
        %v272 = vadd.f32 %v266, %v270
        %v273 = vadd.f32 %v267, %v271
        %s274 = sld [smem:[#allocation2 + $0xf]]
        %v275 = vstv %s274
        %v276 = vadd.f32 %v272, %v275
        %v277 = vadd.f32 %v273, %v275
        %s278 = sld [smem:[#allocation2 + $0xc]]
        %v279 = vstv %s278
        %v280 = vmul.f32 %v279, %v224
        %v281 = vmul.f32 %v279, %v225
        %s282 = sld [smem:[#allocation2 + $0xd]]
        %v283 = vstv %s282
        %v284 = vmul.f32 %v283, %v240
        %v285 = vmul.f32 %v283, %v241
        %v286 = vadd.f32 %v280, %v284
        %v287 = vadd.f32 %v281, %v285
        %s288 = sld [smem:[#allocation2 + $0xe]]
        %v289 = vstv %s288
        %v290 = vmul.f32 %v289, %v256
        %v291 = vmul.f32 %v289, %v257
        %v292 = vadd.f32 %v286, %v290
        %v293 = vadd.f32 %v287, %v291
        %s294 = sld [smem:[#allocation2 + $0x10]]
        %v295 = vstv %s294
        %v296 = vadd.f32 %v292, %v295
        %v297 = vadd.f32 %v293, %v295
        %298 = vst [vmem:[%s202] sm:$0xff] %v276
        %299 = vst [vmem:[%s202 + $0x8] sm:$0xff] %v277
        %300 = vst [vmem:[%s202 + $0x10] sm:$0xff] %v296
        %301 = vst [vmem:[%s202 + $0x18] sm:$0xff] %v297
        %s302 = sand.u32 %s75, 1
        %s303 = scalar_lea.sflag [#allocation4], %s302
        %s304 = sand.u32 %s75, 1
        %s305 = smul.addr %s304, 32
        %s306 = scalar_lea.vmem [#allocation7], %s305
        // Predicated region
        $region37: #{tpu_custom_call.1} parent=27 // pred_check
          %p307 = pneg %p85
        $region38: #{tpu_custom_call.1} parent=27 // pred_check_branch
          %309 = sbr.rel (%p307) target = $region40
        $region39: #{tpu_custom_call.1} parent=27 // pred_region
          #allocation11 [shape = 'u32[6]{0}', space=smem, size = 0x18, scoped, tag = 'DMA stride descriptor']
          %s310 = smul.u32 2, %s20
          %312 = vsyncadd %s303, 0
          %s313 = smul.addr %s310, 8
          %s314 = scalar_lea.hbm %s2, %s313
          %s316 = sshll.u32 1, 14
          %s317 = sxor.u32 4294967295, %s316
          %s320 = sshll.u32 7, 18
          %s321 = sxor.u32 4294967295, %s320
          %s322 = sand.u32 0, %s321
          %s324 = sor.u32 %s322, 0
          %s325 = sshll.u32 %s306, 4
          %s326 = int_to_ptr.vmem [resolvable:$true] %s325
          %s327 = sshll.u32 %s314, 4
          %s328 = int_to_ptr.hbm [resolvable:$true] %s327
          %334 = sst [smem:[#allocation11]] 256
          %s335 = scalar_lea.smem [#allocation11], 1
          %336 = sst [smem:[%s335]] 512
          %s337 = scalar_lea.smem [#allocation11], 2
          %338 = sst [smem:[%s337]] 2
          %s339 = scalar_lea.smem [#allocation11], 3
          %340 = sst [smem:[%s339]] 128
          %s341 = scalar_lea.smem [#allocation11], 4
          %342 = sst [smem:[%s341]] 128
          %s343 = scalar_lea.smem [#allocation11], 5
          %344 = sst [smem:[%s343]] 8
          %346 = dma.general %s326, 512, %s328, %s303, [#allocation10], [#allocation11], %s324, 0
        $region40: #{tpu_custom_call.1} parent=27 // pred_fallthru
          _
      $region28: #{tpu_custom_call.1} parent=5 // pred_fallthru
        _
      %p347 = scmp.le.s32.totalorder 2, %s15
      // Predicated region
      $region41: #{tpu_custom_call.1} parent=5 // pred_check
        %p348 = pneg %p347
      $region42: #{tpu_custom_call.1} parent=5 // pred_check_branch
        %350 = sbr.rel (%p348) target = $region44
      $region43: #{tpu_custom_call.1} parent=5 // pred_region
        %s351 = ssub.s32 %s15, 2
        // Predicated region
        $region45: #{tpu_custom_call.1} parent=43 // pred_check
          %p352 = pneg %p91
        $region46: #{tpu_custom_call.1} parent=43 // pred_check_branch
          %354 = sbr.rel (%p352) target = $region48
        $region47: #{tpu_custom_call.1} parent=43 // pred_region
          %s355 = sand.u32 %s76, 1
          %s356 = scalar_lea.sflag [#allocation4], %s355
          %s357 = sand.u32 %s76, 1
          %s358 = smul.addr %s357, 32
          %s359 = scalar_lea.vmem [#allocation7], %s358
          %361 = dma.done %s356, 512
        $region48: #{tpu_custom_call.1} parent=43 // pred_fallthru
          _
      $region44: #{tpu_custom_call.1} parent=5 // pred_fallthru
        _
    $region6: #{tpu_custom_call.1} parent=1 // loop_footer
      %s19 = sadd.s32 1, %s15
    $region7: #{tpu_custom_call.1} parent=1 // loop_footer_branch
      %14 = sbr.rel target = $region3
    $region8: #{tpu_custom_call.1} parent=1 // loop_exit
      _
    %362 = vsyncpa [#allocation3], 1
    %s363 = scalar_lea.sflag [#allocation3], 1
    %364 = vsyncpa %s363, 1
    %365 = vsyncpa [#allocation4], 1
    %s366 = scalar_lea.sflag [#allocation4], 1
    %367 = vsyncpa %s366, 1
    %368 = vsyncpa [#allocation5], 1
    %s369 = scalar_lea.sflag [#allocation5], 1
    %370 = vsyncpa %s369, 1

</llo_original>
